<compile_context>
chip_gen: v6e
topology: v6e:2x2x1
jax: 0.10.0
libtpu: 0.0.40
codegen_flags: <defaults>
</compile_context>

<pallas_src>
import functools

import jax
import jax.numpy as jnp
from jax.experimental import pallas as pl
from jax.experimental.pallas import tpu as pltpu

_LANE = 128
_SUBLANE = 8


def _round_up(n, m):
    return ((n + m - 1) // m) * m


def logreg_kernel(x_ref, w_ref, b_ref, o_ref):
    # x_ref: (TB, Dp) bf16 batch tile
    # w_ref: (Dp, Cp) bf16 pre-transposed weight (VMEM-resident across steps)
    # b_ref: (1,  Cp) f32 bias
    # o_ref: (TB, Cp) f32 output tile (lane-dense)
    logits = jnp.dot(x_ref[...], w_ref[...],
                     preferred_element_type=jnp.float32)      # MXU, f32 acc
    logits = logits + b_ref[...]                              # f32 VPU
    # sigmoid(x) == 0.5 * tanh(0.5 * x) + 0.5  (single EUP transcendental)
    o_ref[...] = (0.5 * jnp.tanh(0.5 * logits) + 0.5).astype(o_ref.dtype)


@functools.partial(jax.jit, static_argnames=("tb",))
def logreg_forward(x, weight, bias, *, tb=512):
    """x: (B, D) f32, weight: (C, D) f32, bias: (C,) f32 -> (B, C) f32."""
    B, D = x.shape
    C, D2 = weight.shape
    assert D == D2

    # Lane-dense padded dims.
    Dp = _round_up(D, _LANE)
    Cp = _round_up(C, _LANE)

    # Batch tile: multiple of 8 sublanes, capped so double-buffered x + out
    # blocks fit comfortably in VMEM even on v7x (64 MiB physical).
    tb = _round_up(max(1, min(tb, B)), _SUBLANE)
    tb = min(tb, 2048)
    Bp = _round_up(B, tb)

    # Wrapper-side prep (one-time XLA ops, outside the kernel hot path):
    #   pad + bf16-cast x, pad + transpose + bf16-cast weight, pad bias.
    x_p = jnp.pad(x, ((0, Bp - B), (0, Dp - D))).astype(jnp.bfloat16)
    w_t = jnp.pad(weight, ((0, Cp - C), (0, Dp - D))).T.astype(jnp.bfloat16)
    b_p = jnp.pad(bias, (0, Cp - C)).reshape(1, Cp).astype(jnp.float32)

    grid = (Bp // tb,)

    out_padded = pl.pallas_call(
        logreg_kernel,
        out_shape=jax.ShapeDtypeStruct((Bp, Cp), jnp.float32),
        grid_spec=pltpu.PrefetchScalarGridSpec(
            num_scalar_prefetch=0,
            grid=grid,
            in_specs=[
                pl.BlockSpec((tb, Dp), lambda i: (i, 0)),   # batch-tiled x
                pl.BlockSpec((Dp, Cp), lambda i: (0, 0)),   # resident weight
                pl.BlockSpec((1, Cp), lambda i: (0, 0)),    # resident bias
            ],
            out_specs=pl.BlockSpec((tb, Cp), lambda i: (i, 0)),
        ),
        compiler_params=pltpu.CompilerParams(
            # Batch axis is independent -> "parallel" (sharded across both
            # TensorCores on v7x; harmless on v5e/v6e).
            dimension_semantics=("parallel",),
        ),
    )(x_p, w_t, b_p)

    # Discard batch / class padding (padded classes produce sigmoid(0)=0.5).
    return out_padded[:B, :C]


if __name__ == "__main__":
    # MNIST-like but small: input_size=784 features, num_classes=10, batch=8.
    B, D, C = 8, 784, 10
    key = jax.random.PRNGKey(0)
    kx, kw, kb = jax.random.split(key, 3)

    x = jax.random.normal(kx, (B, D), dtype=jnp.float32)
    # Param init mimicking torch.nn.Linear's uniform(-1/sqrt(D), 1/sqrt(D)).
    bound = 1.0 / (D ** 0.5)
    weight = jax.random.uniform(kw, (C, D), minval=-bound, maxval=bound,
                                dtype=jnp.float32)
    bias = jax.random.uniform(kb, (C,), minval=-bound, maxval=bound,
                              dtype=jnp.float32)

    out = logreg_forward(x, weight, bias)
    jax.block_until_ready(out)

    # Reference check in plain JAX (f32). bf16 MXU inputs -> loosened tolerance.
    ref = jax.nn.sigmoid(x @ weight.T + bias)
    assert out.shape == (B, C)
    assert jnp.allclose(out, ref, atol=2e-2, rtol=2e-2), (
        float(jnp.max(jnp.abs(out - ref))))
    print("KERNEL_OK")
</pallas_src>

<mosaic_0001>
module attributes {stable_mosaic.version = 11 : i64} {
  func.func @logreg_kernel(%arg0: i32, %arg1: memref<8x896xbf16, #tpu.memory_space<vmem>>, %arg2: memref<896x128xbf16, #tpu.memory_space<vmem>>, %arg3: memref<1x128xf32, #tpu.memory_space<vmem>>, %arg4: memref<8x128xf32, #tpu.memory_space<vmem>>) attributes {dimension_semantics = [#tpu.dimension_semantics<parallel>], iteration_bounds = array<i64: 1>, scalar_prefetch = 0 : i64, scratch_operands = 0 : i64, tpu.core_type = #tpu.core_type<tc>, window_params = [{transform_indices = @transform_0, window_bounds = array<i64: 8, 896>}, {pipeline_mode = #tpu.pipeline_mode<synchronous>, transform_indices = @transform_1, window_bounds = array<i64: 896, 128>}, {pipeline_mode = #tpu.pipeline_mode<synchronous>, transform_indices = @transform_2, window_bounds = array<i64: 1, 128>}, {transform_indices = @transform_3, window_bounds = array<i64: 8, 128>}]} {
    %c0 = arith.constant 0 : index
    %c0_0 = arith.constant 0 : index
    %0 = vector.load %arg1[%c0, %c0_0] : memref<8x896xbf16, #tpu.memory_space<vmem>>, vector<8x896xbf16>
    %c0_1 = arith.constant 0 : index
    %c0_2 = arith.constant 0 : index
    %1 = vector.load %arg2[%c0_1, %c0_2] : memref<896x128xbf16, #tpu.memory_space<vmem>>, vector<896x128xbf16>
    %cst = arith.constant dense<0.000000e+00> : vector<8x128xf32>
    %2 = tpu.matmul %0, %1, %cst {dimension_numbers = #tpu.dot_dimension_numbers<[1], [0], [0], [1], [0, 0, 1, 1], [], []>} : vector<8x896xbf16>, vector<896x128xbf16>, vector<8x128xf32> -> vector<8x128xf32>
    %c0_3 = arith.constant 0 : index
    %c0_4 = arith.constant 0 : index
    %3 = vector.load %arg3[%c0_3, %c0_4] : memref<1x128xf32, #tpu.memory_space<vmem>>, vector<1x128xf32>
    %4 = vector.broadcast %3 : vector<1x128xf32> to vector<8x128xf32>
    %5 = arith.addf %2, %4 : vector<8x128xf32>
    %cst_5 = arith.constant 5.000000e-01 : f32
    %6 = vector.broadcast %cst_5 : f32 to vector<8x128xf32>
    %7 = arith.mulf %6, %5 : vector<8x128xf32>
    %8 = math.tanh %7 : vector<8x128xf32>
    %cst_6 = arith.constant 5.000000e-01 : f32
    %9 = vector.broadcast %cst_6 : f32 to vector<8x128xf32>
    %10 = arith.mulf %9, %8 : vector<8x128xf32>
    %cst_7 = arith.constant 5.000000e-01 : f32
    %11 = vector.broadcast %cst_7 : f32 to vector<8x128xf32>
    %12 = arith.addf %10, %11 : vector<8x128xf32>
    %c0_8 = arith.constant 0 : index
    %c0_9 = arith.constant 0 : index
    %13 = vector.load %arg4[%c0_8, %c0_9] : memref<8x128xf32, #tpu.memory_space<vmem>>, vector<8x128xf32>
    tpu.vector_store %arg4[%c0_8, %c0_9], %12 {strides = array<i32>} : memref<8x128xf32, #tpu.memory_space<vmem>>, vector<8x128xf32>,
    return
  }
  func.func @transform_0(%arg0: i32) -> (i32, i32) {
    %c0_i32 = arith.constant 0 : i32
    %c0_i32_0 = arith.constant 0 : i32
    return %arg0, %c0_i32 : i32, i32
  }
  func.func @transform_1(%arg0: i32) -> (i32, i32) {
    %c0_i32 = arith.constant 0 : i32
    %c0_i32_0 = arith.constant 0 : i32
    %c0_i32_1 = arith.constant 0 : i32
    return %c0_i32, %c0_i32_0 : i32, i32
  }
  func.func @transform_2(%arg0: i32) -> (i32, i32) {
    %c0_i32 = arith.constant 0 : i32
    %c0_i32_0 = arith.constant 0 : i32
    %c0_i32_1 = arith.constant 0 : i32
    return %c0_i32, %c0_i32_0 : i32, i32
  }
  func.func @transform_3(%arg0: i32) -> (i32, i32) {
    %c0_i32 = arith.constant 0 : i32
    %c0_i32_0 = arith.constant 0 : i32
    return %arg0, %c0_i32 : i32, i32
  }
}

</mosaic_0001>

<llo_original>
// kernel: logreg_forward.1
$region0: #{logreg_forward.1}
  #allocation0 [shape = 'u32[]', space=smem, size = 0x4, offset = 0x4, fixed_abs, tag = 'smem constant byte address 0x4 - core index']
  #allocation1 [shape = 'u32[144,128]{1,0:T(1,128)}', space=vmem, size = 0x12000, scoped, tag = 'internal scratch']
  %s0 = inlined_call_operand.vmem [shape: bf16[8,896], index: 0, kind: input, shape index: {}]
  %s1 = inlined_call_operand.vmem [shape: bf16[896,128], index: 1, kind: input, shape index: {}]
  %s2 = inlined_call_operand.vmem [shape: f32[1,128], index: 2, kind: input, shape index: {}]
  %s3 = inlined_call_operand.hbm [shape: f32[8,128], index: 3, kind: output, shape index: {}]
  %s4 = sld [smem:[#allocation0]]
  $region22: #{logreg_forward.1} parent=0
    _
  %s6 = ssub.s32 1, %s4
  %s7 = scalar_select 0, %s6, %s4
  $region1: #{logreg_forward.1} parent=0
    #allocation2 [shape = 'u8[4096]{0}', space=vmem, size = 0x1000, scoped, tag = 'output window, operand 0, single buffered']
    #allocation3 [shape = 's32[1]{0}', space=sflag, size = 0x4, scoped, tag = 'scoped memory for logreg_forward.1']
    %8 = vsyncpa [#allocation3], 0
    // Predicated region
    $region2: #{logreg_forward.1} parent=1 // pred_check
      _
    $region3: #{logreg_forward.1} parent=1 // pred_check_branch
      %10 = sbr.rel (0) target = $region5
    $region4: #{logreg_forward.1} parent=1 // pred_region
      _
    $region5: #{logreg_forward.1} parent=1 // pred_fallthru
      _
    // Predicated region
    $region6: #{logreg_forward.1} parent=1 // pred_check
      _
    $region7: #{logreg_forward.1} parent=1 // pred_check_branch
      %12 = sbr.rel (0) target = $region9
    $region8: #{logreg_forward.1} parent=1 // pred_region
      _
    $region9: #{logreg_forward.1} parent=1 // pred_fallthru
      _
    // Predicated region
    $region10: #{logreg_forward.1} parent=1 // pred_check
      _
    $region11: #{logreg_forward.1} parent=1 // pred_check_branch
      %14 = sbr.rel (0) target = $region13
    $region12: #{logreg_forward.1} parent=1 // pred_region
      _
    $region13: #{logreg_forward.1} parent=1 // pred_fallthru
      _
    %v16 = vld [vmem:[%s0] sm:$0xff]
    %v17 = vld [vmem:[%s0 + $0x8] sm:$0xff]
    %v18 = vld [vmem:[%s0 + $0x10] sm:$0xff]
    %v19 = vld [vmem:[%s0 + $0x18] sm:$0xf]
    %v20 = vld [vmem:[%s1] sm:$0xf]
    %v21 = vld [vmem:[%s1 + $0x4] sm:$0xf]
    %v22 = vld [vmem:[%s1 + $0x8] sm:$0xf]
    %v23 = vld [vmem:[%s1 + $0xc] sm:$0xf]
    %v24 = vld [vmem:[%s1 + $0x10] sm:$0xf]
    %v25 = vld [vmem:[%s1 + $0x14] sm:$0xf]
    %v26 = vld [vmem:[%s1 + $0x18] sm:$0xf]
    %v27 = vld [vmem:[%s1 + $0x1c] sm:$0xf]
    %v28 = vld [vmem:[%s1 + $0x20] sm:$0xf]
    %v29 = vld [vmem:[%s1 + $0x24] sm:$0xf]
    %v30 = vld [vmem:[%s1 + $0x28] sm:$0xf]
    %v31 = vld [vmem:[%s1 + $0x2c] sm:$0xf]
    %v32 = vld [vmem:[%s1 + $0x30] sm:$0xf]
    %v33 = vld [vmem:[%s1 + $0x34] sm:$0xf]
    %v34 = vld [vmem:[%s1 + $0x38] sm:$0xf]
    %v35 = vld [vmem:[%s1 + $0x3c] sm:$0xf]
    %v36 = vld [vmem:[%s1 + $0x40] sm:$0xf]
    %v37 = vld [vmem:[%s1 + $0x44] sm:$0xf]
    %v38 = vld [vmem:[%s1 + $0x48] sm:$0xf]
    %v39 = vld [vmem:[%s1 + $0x4c] sm:$0xf]
    %v40 = vld [vmem:[%s1 + $0x50] sm:$0xf]
    %v41 = vld [vmem:[%s1 + $0x54] sm:$0xf]
    %v42 = vld [vmem:[%s1 + $0x58] sm:$0xf]
    %v43 = vld [vmem:[%s1 + $0x5c] sm:$0xf]
    %v44 = vld [vmem:[%s1 + $0x60] sm:$0xf]
    %v45 = vld [vmem:[%s1 + $0x64] sm:$0xf]
    %v46 = vld [vmem:[%s1 + $0x68] sm:$0xf]
    %v47 = vld [vmem:[%s1 + $0x6c] sm:$0xf]
    %v48 = vld [vmem:[%s1 + $0x70] sm:$0xf]
    %v49 = vld [vmem:[%s1 + $0x74] sm:$0xf]
    %v50 = vld [vmem:[%s1 + $0x78] sm:$0xf]
    %v51 = vld [vmem:[%s1 + $0x7c] sm:$0xf]
    %v52 = vld [vmem:[%s1 + $0x80] sm:$0xf]
    %v53 = vld [vmem:[%s1 + $0x84] sm:$0xf]
    %v54 = vld [vmem:[%s1 + $0x88] sm:$0xf]
    %v55 = vld [vmem:[%s1 + $0x8c] sm:$0xf]
    %v56 = vld [vmem:[%s1 + $0x90] sm:$0xf]
    %v57 = vld [vmem:[%s1 + $0x94] sm:$0xf]
    %v58 = vld [vmem:[%s1 + $0x98] sm:$0xf]
    %v59 = vld [vmem:[%s1 + $0x9c] sm:$0xf]
    %v60 = vld [vmem:[%s1 + $0xa0] sm:$0xf]
    %v61 = vld [vmem:[%s1 + $0xa4] sm:$0xf]
    %v62 = vld [vmem:[%s1 + $0xa8] sm:$0xf]
    %v63 = vld [vmem:[%s1 + $0xac] sm:$0xf]
    %v64 = vld [vmem:[%s1 + $0xb0] sm:$0xf]
    %v65 = vld [vmem:[%s1 + $0xb4] sm:$0xf]
    %v66 = vld [vmem:[%s1 + $0xb8] sm:$0xf]
    %v67 = vld [vmem:[%s1 + $0xbc] sm:$0xf]
    %v68 = vld [vmem:[%s1 + $0xc0] sm:$0xf]
    %v69 = vld [vmem:[%s1 + $0xc4] sm:$0xf]
    %v70 = vld [vmem:[%s1 + $0xc8] sm:$0xf]
    %v71 = vld [vmem:[%s1 + $0xcc] sm:$0xf]
    %v72 = vld [vmem:[%s1 + $0xd0] sm:$0xf]
    %v73 = vld [vmem:[%s1 + $0xd4] sm:$0xf]
    %v74 = vld [vmem:[%s1 + $0xd8] sm:$0xf]
    %v75 = vld [vmem:[%s1 + $0xdc] sm:$0xf]
    %v76 = vld [vmem:[%s1 + $0xe0] sm:$0xf]
    %v77 = vld [vmem:[%s1 + $0xe4] sm:$0xf]
    %v78 = vld [vmem:[%s1 + $0xe8] sm:$0xf]
    %v79 = vld [vmem:[%s1 + $0xec] sm:$0xf]
    %v80 = vld [vmem:[%s1 + $0xf0] sm:$0xf]
    %v81 = vld [vmem:[%s1 + $0xf4] sm:$0xf]
    %v82 = vld [vmem:[%s1 + $0xf8] sm:$0xf]
    %v83 = vld [vmem:[%s1 + $0xfc] sm:$0xf]
    %v84 = vld [vmem:[%s1 + $0x100] sm:$0xf]
    %v85 = vld [vmem:[%s1 + $0x104] sm:$0xf]
    %v86 = vld [vmem:[%s1 + $0x108] sm:$0xf]
    %v87 = vld [vmem:[%s1 + $0x10c] sm:$0xf]
    %v88 = vld [vmem:[%s1 + $0x110] sm:$0xf]
    %v89 = vld [vmem:[%s1 + $0x114] sm:$0xf]
    %v90 = vld [vmem:[%s1 + $0x118] sm:$0xf]
    %v91 = vld [vmem:[%s1 + $0x11c] sm:$0xf]
    %v92 = vld [vmem:[%s1 + $0x120] sm:$0xf]
    %v93 = vld [vmem:[%s1 + $0x124] sm:$0xf]
    %v94 = vld [vmem:[%s1 + $0x128] sm:$0xf]
    %v95 = vld [vmem:[%s1 + $0x12c] sm:$0xf]
    %v96 = vld [vmem:[%s1 + $0x130] sm:$0xf]
    %v97 = vld [vmem:[%s1 + $0x134] sm:$0xf]
    %v98 = vld [vmem:[%s1 + $0x138] sm:$0xf]
    %v99 = vld [vmem:[%s1 + $0x13c] sm:$0xf]
    %v100 = vld [vmem:[%s1 + $0x140] sm:$0xf]
    %v101 = vld [vmem:[%s1 + $0x144] sm:$0xf]
    %v102 = vld [vmem:[%s1 + $0x148] sm:$0xf]
    %v103 = vld [vmem:[%s1 + $0x14c] sm:$0xf]
    %v104 = vld [vmem:[%s1 + $0x150] sm:$0xf]
    %v105 = vld [vmem:[%s1 + $0x154] sm:$0xf]
    %v106 = vld [vmem:[%s1 + $0x158] sm:$0xf]
    %v107 = vld [vmem:[%s1 + $0x15c] sm:$0xf]
    %v108 = vld [vmem:[%s1 + $0x160] sm:$0xf]
    %v109 = vld [vmem:[%s1 + $0x164] sm:$0xf]
    %v110 = vld [vmem:[%s1 + $0x168] sm:$0xf]
    %v111 = vld [vmem:[%s1 + $0x16c] sm:$0xf]
    %v112 = vld [vmem:[%s1 + $0x170] sm:$0xf]
    %v113 = vld [vmem:[%s1 + $0x174] sm:$0xf]
    %v114 = vld [vmem:[%s1 + $0x178] sm:$0xf]
    %v115 = vld [vmem:[%s1 + $0x17c] sm:$0xf]
    %v116 = vld [vmem:[%s1 + $0x180] sm:$0xf]
    %v117 = vld [vmem:[%s1 + $0x184] sm:$0xf]
    %v118 = vld [vmem:[%s1 + $0x188] sm:$0xf]
    %v119 = vld [vmem:[%s1 + $0x18c] sm:$0xf]
    %v120 = vld [vmem:[%s1 + $0x190] sm:$0xf]
    %v121 = vld [vmem:[%s1 + $0x194] sm:$0xf]
    %v122 = vld [vmem:[%s1 + $0x198] sm:$0xf]
    %v123 = vld [vmem:[%s1 + $0x19c] sm:$0xf]
    %v124 = vld [vmem:[%s1 + $0x1a0] sm:$0xf]
    %v125 = vld [vmem:[%s1 + $0x1a4] sm:$0xf]
    %v126 = vld [vmem:[%s1 + $0x1a8] sm:$0xf]
    %v127 = vld [vmem:[%s1 + $0x1ac] sm:$0xf]
    %v128 = vld [vmem:[%s1 + $0x1b0] sm:$0xf]
    %v129 = vld [vmem:[%s1 + $0x1b4] sm:$0xf]
    %v130 = vld [vmem:[%s1 + $0x1b8] sm:$0xf]
    %v131 = vld [vmem:[%s1 + $0x1bc] sm:$0xf]
    %v132 = vld [vmem:[%s2] sm:$0x1]
    %v134 = vlaneseq
    %v135 = vshrl.u32 %v134, 7
    %v136 = vsub.s32 0, %v135
    %v137 = vrot.slane %v132, %v136
    %v143 = vunpack.c.l.b16 %v16
    %v144 = vunpack.c.h.b16 %v16
    %v145 = vunpack.c.l.b16 %v17
    %v146 = vunpack.c.h.b16 %v17
    %v147 = vunpack.c.l.b16 %v18
    %v148 = vunpack.c.h.b16 %v18
    %v149 = vunpack.c.l.b16 %v19
    %v150 = vpack.c.b16 %v143, %v143
    %v151 = vpack.c.b16 %v144, %v144
    %v152 = vpack.c.b16 %v145, %v145
    %v153 = vpack.c.b16 %v146, %v146
    %v154 = vpack.c.b16 %v147, %v147
    %v155 = vpack.c.b16 %v148, %v148
    %v156 = vpack.c.b16 %v149, %v149
    %v276 = vunpack.c.l.b16 %v20
    %v277 = vunpack.c.l.b16 %v21
    %v278 = vunpack.c.l.b16 %v22
    %v279 = vunpack.c.l.b16 %v23
    %v280 = vunpack.c.l.b16 %v24
    %v281 = vunpack.c.l.b16 %v25
    %v282 = vunpack.c.l.b16 %v26
    %v283 = vunpack.c.l.b16 %v27
    %v284 = vunpack.c.l.b16 %v28
    %v285 = vunpack.c.l.b16 %v29
    %v286 = vunpack.c.l.b16 %v30
    %v287 = vunpack.c.l.b16 %v31
    %v288 = vunpack.c.l.b16 %v32
    %v289 = vunpack.c.l.b16 %v33
    %v290 = vunpack.c.l.b16 %v34
    %v291 = vunpack.c.l.b16 %v35
    %v292 = vunpack.c.l.b16 %v36
    %v293 = vunpack.c.l.b16 %v37
    %v294 = vunpack.c.l.b16 %v38
    %v295 = vunpack.c.l.b16 %v39
    %v296 = vunpack.c.l.b16 %v40
    %v297 = vunpack.c.l.b16 %v41
    %v298 = vunpack.c.l.b16 %v42
    %v299 = vunpack.c.l.b16 %v43
    %v300 = vunpack.c.l.b16 %v44
    %v301 = vunpack.c.l.b16 %v45
    %v302 = vunpack.c.l.b16 %v46
    %v303 = vunpack.c.l.b16 %v47
    %v304 = vunpack.c.l.b16 %v48
    %v305 = vunpack.c.l.b16 %v49
    %v306 = vunpack.c.l.b16 %v50
    %v307 = vunpack.c.l.b16 %v51
    %v308 = vunpack.c.l.b16 %v52
    %v309 = vunpack.c.l.b16 %v53
    %v310 = vunpack.c.l.b16 %v54
    %v311 = vunpack.c.l.b16 %v55
    %v312 = vunpack.c.l.b16 %v56
    %v313 = vunpack.c.l.b16 %v57
    %v314 = vunpack.c.l.b16 %v58
    %v315 = vunpack.c.l.b16 %v59
    %v316 = vunpack.c.l.b16 %v60
    %v317 = vunpack.c.l.b16 %v61
    %v318 = vunpack.c.l.b16 %v62
    %v319 = vunpack.c.l.b16 %v63
    %v320 = vunpack.c.l.b16 %v64
    %v321 = vunpack.c.l.b16 %v65
    %v322 = vunpack.c.l.b16 %v66
    %v323 = vunpack.c.l.b16 %v67
    %v324 = vunpack.c.l.b16 %v68
    %v325 = vunpack.c.l.b16 %v69
    %v326 = vunpack.c.l.b16 %v70
    %v327 = vunpack.c.l.b16 %v71
    %v328 = vunpack.c.l.b16 %v72
    %v329 = vunpack.c.l.b16 %v73
    %v330 = vunpack.c.l.b16 %v74
    %v331 = vunpack.c.l.b16 %v75
    %v332 = vunpack.c.l.b16 %v76
    %v333 = vunpack.c.l.b16 %v77
    %v334 = vunpack.c.l.b16 %v78
    %v335 = vunpack.c.l.b16 %v79
    %v336 = vunpack.c.l.b16 %v80
    %v337 = vunpack.c.l.b16 %v81
    %v338 = vunpack.c.l.b16 %v82
    %v339 = vunpack.c.l.b16 %v83
    %v340 = vunpack.c.l.b16 %v84
    %v341 = vunpack.c.l.b16 %v85
    %v342 = vunpack.c.l.b16 %v86
    %v343 = vunpack.c.l.b16 %v87
    %v344 = vunpack.c.l.b16 %v88
    %v345 = vunpack.c.l.b16 %v89
    %v346 = vunpack.c.l.b16 %v90
    %v347 = vunpack.c.l.b16 %v91
    %v348 = vunpack.c.l.b16 %v92
    %v349 = vunpack.c.l.b16 %v93
    %v350 = vunpack.c.l.b16 %v94
    %v351 = vunpack.c.l.b16 %v95
    %v352 = vunpack.c.l.b16 %v96
    %v353 = vunpack.c.l.b16 %v97
    %v354 = vunpack.c.l.b16 %v98
    %v355 = vunpack.c.l.b16 %v99
    %v356 = vunpack.c.l.b16 %v100
    %v357 = vunpack.c.l.b16 %v101
    %v358 = vunpack.c.l.b16 %v102
    %v359 = vunpack.c.l.b16 %v103
    %v360 = vunpack.c.l.b16 %v104
    %v361 = vunpack.c.l.b16 %v105
    %v362 = vunpack.c.l.b16 %v106
    %v363 = vunpack.c.l.b16 %v107
    %v364 = vunpack.c.l.b16 %v108
    %v365 = vunpack.c.l.b16 %v109
    %v366 = vunpack.c.l.b16 %v110
    %v367 = vunpack.c.l.b16 %v111
    %v368 = vunpack.c.l.b16 %v112
    %v369 = vunpack.c.l.b16 %v113
    %v370 = vunpack.c.l.b16 %v114
    %v371 = vunpack.c.l.b16 %v115
    %v372 = vunpack.c.l.b16 %v116
    %v373 = vunpack.c.l.b16 %v117
    %v374 = vunpack.c.l.b16 %v118
    %v375 = vunpack.c.l.b16 %v119
    %v376 = vunpack.c.l.b16 %v120
    %v377 = vunpack.c.l.b16 %v121
    %v378 = vunpack.c.l.b16 %v122
    %v379 = vunpack.c.l.b16 %v123
    %v380 = vunpack.c.l.b16 %v124
    %v381 = vunpack.c.l.b16 %v125
    %v382 = vunpack.c.l.b16 %v126
    %v383 = vunpack.c.l.b16 %v127
    %v384 = vunpack.c.l.b16 %v128
    %v385 = vunpack.c.l.b16 %v129
    %v386 = vunpack.c.l.b16 %v130
    %v387 = vunpack.c.l.b16 %v131
    %v388 = vpack.c.b16 %v277, %v276
    %v389 = vpack.c.b16 %v279, %v278
    %v390 = vpack.c.b16 %v281, %v280
    %v391 = vpack.c.b16 %v283, %v282
    %v392 = vpack.c.b16 %v285, %v284
    %v393 = vpack.c.b16 %v287, %v286
    %v394 = vpack.c.b16 %v289, %v288
    %v395 = vpack.c.b16 %v291, %v290
    %v396 = vpack.c.b16 %v293, %v292
    %v397 = vpack.c.b16 %v295, %v294
    %v398 = vpack.c.b16 %v297, %v296
    %v399 = vpack.c.b16 %v299, %v298
    %v400 = vpack.c.b16 %v301, %v300
    %v401 = vpack.c.b16 %v303, %v302
    %v402 = vpack.c.b16 %v305, %v304
    %v403 = vpack.c.b16 %v307, %v306
    %v404 = vpack.c.b16 %v309, %v308
    %v405 = vpack.c.b16 %v311, %v310
    %v406 = vpack.c.b16 %v313, %v312
    %v407 = vpack.c.b16 %v315, %v314
    %v408 = vpack.c.b16 %v317, %v316
    %v409 = vpack.c.b16 %v319, %v318
    %v410 = vpack.c.b16 %v321, %v320
    %v411 = vpack.c.b16 %v323, %v322
    %v412 = vpack.c.b16 %v325, %v324
    %v413 = vpack.c.b16 %v327, %v326
    %v414 = vpack.c.b16 %v329, %v328
    %v415 = vpack.c.b16 %v331, %v330
    %v416 = vpack.c.b16 %v333, %v332
    %v417 = vpack.c.b16 %v335, %v334
    %v418 = vpack.c.b16 %v337, %v336
    %v419 = vpack.c.b16 %v339, %v338
    %v420 = vpack.c.b16 %v341, %v340
    %v421 = vpack.c.b16 %v343, %v342
    %v422 = vpack.c.b16 %v345, %v344
    %v423 = vpack.c.b16 %v347, %v346
    %v424 = vpack.c.b16 %v349, %v348
    %v425 = vpack.c.b16 %v351, %v350
    %v426 = vpack.c.b16 %v353, %v352
    %v427 = vpack.c.b16 %v355, %v354
    %v428 = vpack.c.b16 %v357, %v356
    %v429 = vpack.c.b16 %v359, %v358
    %v430 = vpack.c.b16 %v361, %v360
    %v431 = vpack.c.b16 %v363, %v362
    %v432 = vpack.c.b16 %v365, %v364
    %v433 = vpack.c.b16 %v367, %v366
    %v434 = vpack.c.b16 %v369, %v368
    %v435 = vpack.c.b16 %v371, %v370
    %v436 = vpack.c.b16 %v373, %v372
    %v437 = vpack.c.b16 %v375, %v374
    %v438 = vpack.c.b16 %v377, %v376
    %v439 = vpack.c.b16 %v379, %v378
    %v440 = vpack.c.b16 %v381, %v380
    %v441 = vpack.c.b16 %v383, %v382
    %v442 = vpack.c.b16 %v385, %v384
    %v443 = vpack.c.b16 %v387, %v386
    %500 = vmatprep.subr.bf16.mxu0 0
    %501 = vmatpush1.bf16.msra.mxu0 %v395
    %502 = vmatprep.subr.bf16.mxu0 0
    %503 = vmatpush1.bf16.msra.mxu0 %v394
    %504 = vmatprep.subr.bf16.mxu0 0
    %505 = vmatpush1.bf16.msra.mxu0 %v393
    %506 = vmatprep.subr.bf16.mxu0 0
    %507 = vmatpush1.bf16.msra.mxu0 %v392
    %508 = vmatprep.subr.bf16.mxu0 0
    %509 = vmatpush1.bf16.msra.mxu0 %v391
    %510 = vmatprep.subr.bf16.mxu0 0
    %511 = vmatpush1.bf16.msra.mxu0 %v390
    %512 = vmatprep.subr.bf16.mxu0 0
    %513 = vmatpush1.bf16.msra.mxu0 %v389
    %514 = vmatprep.subr.bf16.mxu0 0
    %515 = vmatpush1.bf16.msra.mxu0 %v388
    %516 = vmatprep.subr.bf16.mxu0 0
    %517 = vmatpush2.bf16.msra.mxu0 %v403
    %518 = vmatprep.subr.bf16.mxu0 0
    %519 = vmatpush2.bf16.msra.mxu0 %v402
    %520 = vmatprep.subr.bf16.mxu0 0
    %521 = vmatpush2.bf16.msra.mxu0 %v401
    %522 = vmatprep.subr.bf16.mxu0 0
    %523 = vmatpush2.bf16.msra.mxu0 %v400
    %524 = vmatprep.subr.bf16.mxu0 0
    %525 = vmatpush2.bf16.msra.mxu0 %v399
    %526 = vmatprep.subr.bf16.mxu0 0
    %527 = vmatpush2.bf16.msra.mxu0 %v398
    %528 = vmatprep.subr.bf16.mxu0 0
    %529 = vmatpush2.bf16.msra.mxu0 %v397
    %530 = vmatprep.subr.bf16.mxu0 0
    %531 = vmatpush2.bf16.msra.mxu0 %v396
    %532 = vmatprep.mubr.bf16.mxu0 %v151
    %533 = vmatmul.mubr.bf16.gmra.mxu0 %v150
    %v534 = vpop.f32.mrf.mxu0
    %v535 = vadd.f32 %v137, %v534
    %v536 = vpop.f32.mrf.mxu0
    %v537 = vpop.f32.mrf.mxu0
    %v538 = vpop.f32.mrf.mxu0
    %539 = vdwg.mxu0
    %540 = vmatprep.subr.bf16.mxu0 0
    %541 = vmatpush1.bf16.msra.mxu0 %v411
    %542 = vmatprep.subr.bf16.mxu0 0
    %543 = vmatpush1.bf16.msra.mxu0 %v410
    %544 = vmatprep.subr.bf16.mxu0 0
    %545 = vmatpush1.bf16.msra.mxu0 %v409
    %546 = vmatprep.subr.bf16.mxu0 0
    %547 = vmatpush1.bf16.msra.mxu0 %v408
    %548 = vmatprep.subr.bf16.mxu0 0
    %549 = vmatpush1.bf16.msra.mxu0 %v407
    %550 = vmatprep.subr.bf16.mxu0 0
    %551 = vmatpush1.bf16.msra.mxu0 %v406
    %552 = vmatprep.subr.bf16.mxu0 0
    %553 = vmatpush1.bf16.msra.mxu0 %v405
    %554 = vmatprep.subr.bf16.mxu0 0
    %555 = vmatpush1.bf16.msra.mxu0 %v404
    %556 = vmatprep.subr.bf16.mxu0 0
    %557 = vmatpush2.bf16.msra.mxu0 %v419
    %558 = vmatprep.subr.bf16.mxu0 0
    %559 = vmatpush2.bf16.msra.mxu0 %v418
    %560 = vmatprep.subr.bf16.mxu0 0
    %561 = vmatpush2.bf16.msra.mxu0 %v417
    %562 = vmatprep.subr.bf16.mxu0 0
    %563 = vmatpush2.bf16.msra.mxu0 %v416
    %564 = vmatprep.subr.bf16.mxu0 0
    %565 = vmatpush2.bf16.msra.mxu0 %v415
    %566 = vmatprep.subr.bf16.mxu0 0
    %567 = vmatpush2.bf16.msra.mxu0 %v414
    %568 = vmatprep.subr.bf16.mxu0 0
    %569 = vmatpush2.bf16.msra.mxu0 %v413
    %570 = vmatprep.subr.bf16.mxu0 0
    %571 = vmatpush2.bf16.msra.mxu0 %v412
    %572 = vmatprep.mubr.bf16.mxu0 %v153
    %573 = vmatmul.mubr.bf16.gmra.mxu0 %v152
    %v574 = vpop.f32.mrf.mxu0
    %v575 = vadd.f32 %v535, %v574
    %v576 = vpop.f32.mrf.mxu0
    %v577 = vpop.f32.mrf.mxu0
    %v578 = vpop.f32.mrf.mxu0
    %579 = vdwg.mxu0
    %580 = vmatprep.subr.bf16.mxu0 0
    %581 = vmatpush1.bf16.msra.mxu0 %v427
    %582 = vmatprep.subr.bf16.mxu0 0
    %583 = vmatpush1.bf16.msra.mxu0 %v426
    %584 = vmatprep.subr.bf16.mxu0 0
    %585 = vmatpush1.bf16.msra.mxu0 %v425
    %586 = vmatprep.subr.bf16.mxu0 0
    %587 = vmatpush1.bf16.msra.mxu0 %v424
    %588 = vmatprep.subr.bf16.mxu0 0
    %589 = vmatpush1.bf16.msra.mxu0 %v423
    %590 = vmatprep.subr.bf16.mxu0 0
    %591 = vmatpush1.bf16.msra.mxu0 %v422
    %592 = vmatprep.subr.bf16.mxu0 0
    %593 = vmatpush1.bf16.msra.mxu0 %v421
    %594 = vmatprep.subr.bf16.mxu0 0
    %595 = vmatpush1.bf16.msra.mxu0 %v420
    %596 = vmatprep.subr.bf16.mxu0 0
    %597 = vmatpush2.bf16.msra.mxu0 %v435
    %598 = vmatprep.subr.bf16.mxu0 0
    %599 = vmatpush2.bf16.msra.mxu0 %v434
    %600 = vmatprep.subr.bf16.mxu0 0
    %601 = vmatpush2.bf16.msra.mxu0 %v433
    %602 = vmatprep.subr.bf16.mxu0 0
    %603 = vmatpush2.bf16.msra.mxu0 %v432
    %604 = vmatprep.subr.bf16.mxu0 0
    %605 = vmatpush2.bf16.msra.mxu0 %v431
    %606 = vmatprep.subr.bf16.mxu0 0
    %607 = vmatpush2.bf16.msra.mxu0 %v430
    %608 = vmatprep.subr.bf16.mxu0 0
    %609 = vmatpush2.bf16.msra.mxu0 %v429
    %610 = vmatprep.subr.bf16.mxu0 0
    %611 = vmatpush2.bf16.msra.mxu0 %v428
    %612 = vmatprep.mubr.bf16.mxu0 %v155
    %613 = vmatmul.mubr.bf16.gmra.mxu0 %v154
    %v614 = vpop.f32.mrf.mxu0
    %v615 = vadd.f32 %v575, %v614
    %v616 = vpop.f32.mrf.mxu0
    %v617 = vpop.f32.mrf.mxu0
    %v618 = vpop.f32.mrf.mxu0
    %619 = vdwg.mxu0
    %620 = vmatprep.subr.bf16.mxu0 0
    %621 = vmatpush1.bf16.msra.mxu0 %v443
    %622 = vmatprep.subr.bf16.mxu0 0
    %623 = vmatpush1.bf16.msra.mxu0 %v442
    %624 = vmatprep.subr.bf16.mxu0 0
    %625 = vmatpush1.bf16.msra.mxu0 %v441
    %626 = vmatprep.subr.bf16.mxu0 0
    %627 = vmatpush1.bf16.msra.mxu0 %v440
    %628 = vmatprep.subr.bf16.mxu0 0
    %629 = vmatpush1.bf16.msra.mxu0 %v439
    %630 = vmatprep.subr.bf16.mxu0 0
    %631 = vmatpush1.bf16.msra.mxu0 %v438
    %632 = vmatprep.subr.bf16.mxu0 0
    %633 = vmatpush1.bf16.msra.mxu0 %v437
    %634 = vmatprep.subr.bf16.mxu0 0
    %635 = vmatpush1.bf16.msra.mxu0 %v436
    %636 = vmatprep.subr.bf16.mxu0 0
    %637 = vmatpush2.bf16.msra.mxu0 0
    %638 = vmatprep.subr.bf16.mxu0 0
    %639 = vmatpush2.bf16.msra.mxu0 0
    %640 = vmatprep.subr.bf16.mxu0 0
    %641 = vmatpush2.bf16.msra.mxu0 0
    %642 = vmatprep.subr.bf16.mxu0 0
    %643 = vmatpush2.bf16.msra.mxu0 0
    %644 = vmatprep.subr.bf16.mxu0 0
    %645 = vmatpush2.bf16.msra.mxu0 0
    %646 = vmatprep.subr.bf16.mxu0 0
    %647 = vmatpush2.bf16.msra.mxu0 0
    %648 = vmatprep.subr.bf16.mxu0 0
    %649 = vmatpush2.bf16.msra.mxu0 0
    %650 = vmatprep.subr.bf16.mxu0 0
    %651 = vmatpush2.bf16.msra.mxu0 0
    %652 = vmatprep.mubr.bf16.mxu0 0
    %653 = vmatmul.mubr.bf16.gmra.mxu0 %v156
    %v654 = vpop.f32.mrf.mxu0
    %v655 = vadd.f32 %v615, %v654
    %v656 = vpop.f32.mrf.mxu0
    %v657 = vpop.f32.mrf.mxu0
    %v658 = vpop.f32.mrf.mxu0
    %659 = vdwg.mxu0
    %v660 = vmul.f32 %v655, 0.5
    %v661 = vtanh.pop %v660
    %v662 = vmul.f32 %v661, 0.5
    %v663 = vadd.f32 %v662, 0.5
    %664 = vst [vmem:[#allocation2] sm:$0xff] %v663
    // Predicated region
    $region14: #{logreg_forward.1} parent=1 // pred_check
      _
    $region15: #{logreg_forward.1} parent=1 // pred_check_branch
      %666 = sbr.rel (0) target = $region17
    $region16: #{logreg_forward.1} parent=1 // pred_region
      %s668 = ssub.s32 128, 128
      %669 = vsyncadd [#allocation3], %s668
      %s671 = sshll.u32 [#allocation2], 4
      %s672 = int_to_ptr.vmem [resolvable:$true] %s671
      %674 = dma.vmem_to_hbm [thread:$0]  %s672, 128, %s3, [#allocation3]
    $region17: #{logreg_forward.1} parent=1 // pred_fallthru
      _
    // Predicated region
    $region18: #{logreg_forward.1} parent=1 // pred_check
      _
    $region19: #{logreg_forward.1} parent=1 // pred_check_branch
      %676 = sbr.rel (0) target = $region21
    $region20: #{logreg_forward.1} parent=1 // pred_region
      %677 = dma.done [#allocation3], 128
    $region21: #{logreg_forward.1} parent=1 // pred_fallthru
      _
    %678 = vsyncpa [#allocation3], 1

</llo_original>
